<compile_context>
chip_gen: v6e
topology: v6e:2x2x1
jax: 0.10.0
libtpu: 0.0.40
codegen_flags: <defaults>
</compile_context>

<pallas_src>
import functools

import jax
import jax.numpy as jnp
from jax.experimental import pallas as pl
from jax.experimental.pallas import tpu as pltpu


def _round_up(x, m):
    return (x + m - 1) // m * m


def _pick_p_tile(p, target=2048):
    """Largest multiple-of-128 tile <= target that divides p (or p itself)."""
    if p <= target:
        return p
    t = (target // 128) * 128
    while t >= 128:
        if p % t == 0:
            return t
        t -= 128
    return p


def nima_kernel(x_ref, wt_ref, fcw_ref, fcb_ref, o_ref, acc_ref, *, inv_p):
    """Fused backbone + head for one batch row; one spatial tile per grid step.

    x_ref:   (C, PT)      image tile (channels on sublanes, positions on lanes)
    wt_ref:  (F, C)       1x1-conv weight (transposed), streamed dtype
    fcw_ref: (F, NCP)     fc weight, class dim zero-padded to lane width
    fcb_ref: (1, NCP)     fc bias, padded classes = -1e30 (softmax ignores them)
    o_ref:   (1, NCP)     softmax probabilities for this batch row
    acc_ref: (F, 1) f32   running sum of relu(conv) over spatial positions
    """
    k = pl.program_id(1)

    @pl.when(k == 0)
    def _init():
        acc_ref[...] = jnp.zeros_like(acc_ref)

    # 1x1 conv over channels: (F, C) @ (C, PT) -> (F, PT), f32 accumulate (MXU).
    z = jnp.dot(wt_ref[...], x_ref[...], preferred_element_type=jnp.float32)
    z = jnp.maximum(z, 0.0)                              # ReLU in f32 (v5e-safe)
    acc_ref[...] += jnp.sum(z, axis=1, keepdims=True)    # partial GAP sum

    @pl.when(k == pl.num_programs(1) - 1)
    def _finalize():
        feats = acc_ref[...] * inv_p                     # (F, 1): GAP mean
        # fc head: logits[0, n] = sum_f feats[f] * fcw[f, n] + b[n]
        # (K = F is tiny: VPU broadcast-multiply + sublane reduce, MXU not needed)
        logits = jnp.sum(feats * fcw_ref[...], axis=0, keepdims=True) + fcb_ref[...]
        # numerically-stable softmax over the class (lane) axis
        m = jnp.max(logits, axis=1, keepdims=True)
        e = jnp.exp(logits - m)
        denom = jnp.sum(e, axis=1, keepdims=True)
        o_ref[...] = (e * pl.reciprocal(denom, approx=True)).astype(o_ref.dtype)


def nima_forward(img_nchw, conv_w, fc_w, fc_b, *, p_tile=None,
                 stream_dtype=jnp.bfloat16):
    """Nima forward pass with a synthetic 1x1-conv backbone.

    img_nchw: (B, C_in, H, W)     PyTorch NCHW layout
    conv_w:   (C_in, n_features)  synthetic backbone 1x1-conv weight
    fc_w:     (n_features, n_classes)
    fc_b:     (n_classes,)
    returns:  (B, n_classes) softmax probabilities
    """
    B, C, H, W = img_nchw.shape
    F = conv_w.shape[1]
    n_classes = fc_w.shape[1]
    P = H * W

    if p_tile is None:
        p_tile = _pick_p_tile(P)
    assert P % p_tile == 0, (P, p_tile)
    kt = P // p_tile

    nc_pad = _round_up(max(n_classes, 128), 128)     # lane-dense class dim

    # NCHW -> (B, C, P): a pure reshape (no transpose).  Streamed in bf16 to
    # halve HBM traffic (free if the producer already emits bf16); all
    # accumulation stays f32 inside the kernel.
    x = img_nchw.reshape(B, C, P).astype(stream_dtype)
    wt = conv_w.T.astype(stream_dtype)                                  # (F, C)

    fcw_pad = jnp.zeros((F, nc_pad), jnp.float32).at[:, :n_classes].set(
        fc_w.astype(jnp.float32))
    fcb_pad = jnp.full((1, nc_pad), -1e30, jnp.float32).at[0, :n_classes].set(
        fc_b.astype(jnp.float32))

    kernel = functools.partial(nima_kernel, inv_p=1.0 / float(P))

    out = pl.pallas_call(
        kernel,
        out_shape=jax.ShapeDtypeStruct((B, 1, nc_pad), jnp.float32),
        grid=(B, kt),
        in_specs=[
            # Streamed image tile (double-buffered by the pipeline; consider
            # pipeline_mode=pl.Buffered(3) on v7x if DMA latency is exposed).
            pl.BlockSpec((None, C, p_tile), lambda b, k: (b, 0, k)),
            pl.BlockSpec((F, C), lambda b, k: (0, 0)),
            pl.BlockSpec((F, nc_pad), lambda b, k: (0, 0)),
            pl.BlockSpec((1, nc_pad), lambda b, k: (0, 0)),
        ],
        out_specs=pl.BlockSpec((None, 1, nc_pad), lambda b, k: (b, 0, 0)),
        scratch_shapes=[pltpu.VMEM((F, 1), jnp.float32)],
        compiler_params=pltpu.CompilerParams(
            dimension_semantics=("parallel", "arbitrary")),
    )(x, wt, fcw_pad, fcb_pad)

    return out[:, 0, :n_classes]


def nima_reference(img, conv_w, fc_w, fc_b, stream_dtype=jnp.bfloat16):
    """Pure-JAX reference with the same bf16 input rounding as the kernel."""
    B, C, H, W = img.shape
    x = img.astype(stream_dtype).astype(jnp.float32).reshape(B, C, H * W)
    w = conv_w.astype(stream_dtype).astype(jnp.float32)          # (C, F)
    y = jnp.einsum("bcp,cf->bfp", x, w)
    y = jnp.maximum(y, 0.0)
    feats = jnp.mean(y, axis=2)                                  # (B, F)
    logits = feats @ fc_w.astype(jnp.float32) + fc_b.astype(jnp.float32)[None, :]
    return jax.nn.softmax(logits, axis=1)


if __name__ == "__main__":
    B, C_in, H, W = 2, 4, 16, 16
    n_features, n_classes = 32, 10

    key = jax.random.PRNGKey(0)
    k_img, k_conv, k_fcw, k_fcb = jax.random.split(key, 4)

    img = jax.random.normal(k_img, (B, C_in, H, W), dtype=jnp.float32)
    conv_w = jax.random.normal(k_conv, (C_in, n_features), dtype=jnp.float32) * 0.1
    fc_w = jax.random.normal(k_fcw, (n_features, n_classes), dtype=jnp.float32) * 0.1
    fc_b = jax.random.normal(k_fcb, (n_classes,), dtype=jnp.float32) * 0.01

    # p_tile=128 -> spatial grid of 2 steps, exercising the accumulator path.
    fwd = jax.jit(functools.partial(nima_forward, p_tile=128))
    out = jax.block_until_ready(fwd(img, conv_w, fc_w, fc_b))

    ref = nima_reference(img, conv_w, fc_w, fc_b)

    assert out.shape == (B, n_classes)
    # softmax rows must sum to 1 (approx reciprocal -> generous tolerance)
    assert bool(jnp.allclose(jnp.sum(out, axis=1), 1.0, atol=1e-2))
    assert bool(jnp.allclose(out, ref, atol=1e-2))
    print("KERNEL_OK")
</pallas_src>

<mosaic_0001>
module attributes {stable_mosaic.version = 11 : i64} {
  func.func @nima_kernel(%arg0: i32, %arg1: i32, %arg2: memref<1x4x128xbf16, #tpu.memory_space<vmem>>, %arg3: memref<32x4xbf16, #tpu.memory_space<vmem>>, %arg4: memref<32x128xf32, #tpu.memory_space<vmem>>, %arg5: memref<1x128xf32, #tpu.memory_space<vmem>>, %arg6: memref<1x1x128xf32, #tpu.memory_space<vmem>>, %arg7: memref<32x1xf32, #tpu.memory_space<vmem>>) attributes {dimension_semantics = [#tpu.dimension_semantics<parallel>, #tpu.dimension_semantics<arbitrary>], iteration_bounds = array<i64: 2, 2>, scalar_prefetch = 0 : i64, scratch_operands = 1 : i64, tpu.core_type = #tpu.core_type<tc>, window_params = [{transform_indices = @transform_0, window_bounds = array<i64: 1, 4, 128>}, {pipeline_mode = #tpu.pipeline_mode<synchronous>, transform_indices = @transform_1, window_bounds = array<i64: 32, 4>}, {pipeline_mode = #tpu.pipeline_mode<synchronous>, transform_indices = @transform_2, window_bounds = array<i64: 32, 128>}, {pipeline_mode = #tpu.pipeline_mode<synchronous>, transform_indices = @transform_3, window_bounds = array<i64: 1, 128>}, {transform_indices = @transform_4, window_bounds = array<i64: 1, 1, 128>}]} {
    %c0_i32 = arith.constant 0 : i32
    %0 = arith.cmpi eq, %arg1, %c0_i32 : i32
    %1 = arith.extui %0 : i1 to i32
    %c0_i32_0 = arith.constant 0 : i32
    %2 = arith.cmpi ne, %1, %c0_i32_0 : i32
    scf.if %2 {
      %cst_12 = arith.constant 0.000000e+00 : f32
      %17 = vector.broadcast %cst_12 : f32 to vector<32x1xf32>
      %c0_13 = arith.constant 0 : index
      %c0_14 = arith.constant 0 : index
      %18 = vector.load %arg7[%c0_13, %c0_14] : memref<32x1xf32, #tpu.memory_space<vmem>>, vector<32x1xf32>
      tpu.vector_store %arg7[%c0_13, %c0_14], %17 {strides = array<i32>} : memref<32x1xf32, #tpu.memory_space<vmem>>, vector<32x1xf32>,
    } else {
    }
    %c0 = arith.constant 0 : index
    %c0_1 = arith.constant 0 : index
    %3 = vector.load %arg3[%c0, %c0_1] : memref<32x4xbf16, #tpu.memory_space<vmem>>, vector<32x4xbf16>
    %c0_2 = arith.constant 0 : index
    %c0_3 = arith.constant 0 : index
    %c0_4 = arith.constant 0 : index
    %4 = vector.load %arg2[%c0_2, %c0_3, %c0_4] : memref<1x4x128xbf16, #tpu.memory_space<vmem>>, vector<1x4x128xbf16>
    %5 = vector.shape_cast %4 : vector<1x4x128xbf16> to vector<4x128xbf16>
    %cst = arith.constant dense<0.000000e+00> : vector<32x128xf32>
    %6 = tpu.matmul %3, %5, %cst {dimension_numbers = #tpu.dot_dimension_numbers<[1], [0], [0], [1], [0, 0, 1, 1], [], []>} : vector<32x4xbf16>, vector<4x128xbf16>, vector<32x128xf32> -> vector<32x128xf32>
    %cst_5 = arith.constant 0.000000e+00 : f32
    %7 = vector.broadcast %cst_5 : f32 to vector<32x128xf32>
    %8 = arith.maximumf %6, %7 : vector<32x128xf32>
    %c0_6 = arith.constant 0 : index
    %c0_7 = arith.constant 0 : index
    %9 = vector.load %arg7[%c0_6, %c0_7] : memref<32x1xf32, #tpu.memory_space<vmem>>, vector<32x1xf32>
    %cst_8 = arith.constant dense<0.000000e+00> : vector<32xf32>
    %10 = vector.multi_reduction <add>, %8, %cst_8 [1] : vector<32x128xf32> to vector<32xf32>
    %11 = vector.shape_cast %10 : vector<32xf32> to vector<32x1xf32>
    %12 = arith.addf %9, %11 : vector<32x1xf32>
    %c0_9 = arith.constant 0 : index
    %c0_10 = arith.constant 0 : index
    %13 = vector.load %arg7[%c0_9, %c0_10] : memref<32x1xf32, #tpu.memory_space<vmem>>, vector<32x1xf32>
    tpu.vector_store %arg7[%c0_9, %c0_10], %12 {strides = array<i32>} : memref<32x1xf32, #tpu.memory_space<vmem>>, vector<32x1xf32>,
    %c1_i32 = arith.constant 1 : i32
    %14 = arith.cmpi eq, %arg1, %c1_i32 : i32
    %15 = arith.extui %14 : i1 to i32
    %c0_i32_11 = arith.constant 0 : i32
    %16 = arith.cmpi ne, %15, %c0_i32_11 : i32
    scf.if %16 {
      %c0_12 = arith.constant 0 : index
      %c0_13 = arith.constant 0 : index
      %17 = vector.load %arg7[%c0_12, %c0_13] : memref<32x1xf32, #tpu.memory_space<vmem>>, vector<32x1xf32>
      %cst_14 = arith.constant 3.906250e-03 : f32
      %18 = vector.broadcast %cst_14 : f32 to vector<32x1xf32>
      %19 = arith.mulf %17, %18 : vector<32x1xf32>
      %c0_15 = arith.constant 0 : index
      %c0_16 = arith.constant 0 : index
      %20 = vector.load %arg4[%c0_15, %c0_16] : memref<32x128xf32, #tpu.memory_space<vmem>>, vector<32x128xf32>
      %21 = vector.broadcast %19 : vector<32x1xf32> to vector<32x128xf32>
      %22 = arith.mulf %21, %20 : vector<32x128xf32>
      %cst_17 = arith.constant dense<0.000000e+00> : vector<128xf32>
      %23 = vector.multi_reduction <add>, %22, %cst_17 [0] : vector<32x128xf32> to vector<128xf32>
      %24 = vector.shape_cast %23 : vector<128xf32> to vector<1x128xf32>
      %c0_18 = arith.constant 0 : index
      %c0_19 = arith.constant 0 : index
      %25 = vector.load %arg5[%c0_18, %c0_19] : memref<1x128xf32, #tpu.memory_space<vmem>>, vector<1x128xf32>
      %26 = arith.addf %24, %25 : vector<1x128xf32>
      %cst_20 = arith.constant dense<0xFF800000> : vector<1xf32>
      %27 = vector.multi_reduction <maximumf>, %26, %cst_20 [1] : vector<1x128xf32> to vector<1xf32>
      %28 = vector.shape_cast %27 : vector<1xf32> to vector<1x1xf32>
      %29 = vector.broadcast %28 : vector<1x1xf32> to vector<1x128xf32>
      %30 = arith.subf %26, %29 : vector<1x128xf32>
      %31 = math.exp %30 : vector<1x128xf32>
      %cst_21 = arith.constant dense<0.000000e+00> : vector<1xf32>
      %32 = vector.multi_reduction <add>, %31, %cst_21 [1] : vector<1x128xf32> to vector<1xf32>
      %33 = vector.shape_cast %32 : vector<1xf32> to vector<1x1xf32>
      %34 = tpu.reciprocal %33 {approx = true} : vector<1x1xf32> -> vector<1x1xf32>
      %35 = vector.broadcast %34 : vector<1x1xf32> to vector<1x128xf32>
      %36 = arith.mulf %31, %35 : vector<1x128xf32>
      %c0_22 = arith.constant 0 : index
      %c0_23 = arith.constant 0 : index
      %c0_24 = arith.constant 0 : index
      %37 = vector.load %arg6[%c0_22, %c0_23, %c0_24] : memref<1x1x128xf32, #tpu.memory_space<vmem>>, vector<1x1x128xf32>
      %38 = vector.shape_cast %37 : vector<1x1x128xf32> to vector<1x128xf32>
      %39 = vector.shape_cast %36 : vector<1x128xf32> to vector<1x1x128xf32>
      tpu.vector_store %arg6[%c0_22, %c0_23, %c0_24], %39 {strides = array<i32>} : memref<1x1x128xf32, #tpu.memory_space<vmem>>, vector<1x1x128xf32>,
    } else {
    }
    return
  }
  func.func @transform_0(%arg0: i32, %arg1: i32) -> (i32, i32, i32) {
    %c0_i32 = arith.constant 0 : i32
    %c0_i32_0 = arith.constant 0 : i32
    return %arg0, %c0_i32, %arg1 : i32, i32, i32
  }
  func.func @transform_1(%arg0: i32, %arg1: i32) -> (i32, i32) {
    %c0_i32 = arith.constant 0 : i32
    %c0_i32_0 = arith.constant 0 : i32
    %c0_i32_1 = arith.constant 0 : i32
    return %c0_i32, %c0_i32_0 : i32, i32
  }
  func.func @transform_2(%arg0: i32, %arg1: i32) -> (i32, i32) {
    %c0_i32 = arith.constant 0 : i32
    %c0_i32_0 = arith.constant 0 : i32
    %c0_i32_1 = arith.constant 0 : i32
    return %c0_i32, %c0_i32_0 : i32, i32
  }
  func.func @transform_3(%arg0: i32, %arg1: i32) -> (i32, i32) {
    %c0_i32 = arith.constant 0 : i32
    %c0_i32_0 = arith.constant 0 : i32
    %c0_i32_1 = arith.constant 0 : i32
    return %c0_i32, %c0_i32_0 : i32, i32
  }
  func.func @transform_4(%arg0: i32, %arg1: i32) -> (i32, i32, i32) {
    %c0_i32 = arith.constant 0 : i32
    %c0_i32_0 = arith.constant 0 : i32
    %c0_i32_1 = arith.constant 0 : i32
    return %arg0, %c0_i32, %c0_i32_0 : i32, i32, i32
  }
}

</mosaic_0001>

<llo_original>
// kernel: nima_forward.1
$region0: #{nima_forward.1}
  #allocation0 [shape = 'u32[]', space=smem, size = 0x4, offset = 0x4, fixed_abs, tag = 'smem constant byte address 0x4 - core index']
  #allocation1 [shape = 'u32[144,128]{1,0:T(1,128)}', space=vmem, size = 0x12000, scoped, tag = 'internal scratch']
  #allocation2 [shape = 'f32[32,1]{1,0:T(8,128)}', space=vmem, size = 0x4000, scoped, tag = 'scratch operand']
  %s0 = inlined_call_operand.vmem [shape: bf16[2,4,256], index: 0, kind: input, shape index: {}]
  %s1 = inlined_call_operand.vmem [shape: bf16[32,4], index: 1, kind: input, shape index: {}]
  %s2 = inlined_call_operand.vmem [shape: f32[32,128], index: 2, kind: input, shape index: {}]
  %s3 = inlined_call_operand.vmem [shape: f32[1,128], index: 3, kind: input, shape index: {}]
  %s4 = inlined_call_operand.hbm [shape: f32[2,1,128], index: 4, kind: output, shape index: {}]
  %s5 = sld [smem:[#allocation0]]
  $region57: #{nima_forward.1} parent=0
    _
  %s7 = ssub.s32 1, %s5
  %s8 = scalar_select 0, %s7, %s5
  $region1: #{nima_forward.1} parent=0
    #allocation3 [shape = 'u8[1024]{0}', space=vmem, size = 0x400, scoped, tag = 'output window, operand 0']
    #allocation4 [shape = 's32[2]{0}', space=sflag, size = 0x8, scoped, tag = 'scoped memory for nima_forward.1']
    %9 = vsyncpa [#allocation4], 0
    %s10 = scalar_lea.sflag [#allocation4], 1
    %11 = vsyncpa %s10, 0
    loop: start=0, step=1, limit=6
    $region2: #{nima_forward.1} parent=1 // loop_pre_header
      _
    $region3: #{nima_forward.1} parent=1 // loop_header
      %s13 = sphi 0, %s17
      %p14 = scmp.ge.s32.totalorder %s13, 6
      %s20 = sphi 0, %s32
      %s21 = sphi 0, %s28
      %s22 = sphi 0, %s20
      %s23 = sphi 0, %s21
      %s24 = sphi 0, %s22
      %s25 = sphi 0, %s23
      %s37 = sphi 0, %s39
      %s40 = sphi 0, %s37
      %s41 = sphi 0, %s40
      %s57 = sphi 0, %s41
      %s61 = sphi 0, %s61
      %s63 = sphi 0, %s61
      %s64 = sphi 0, %s63
      %s78 = sphi 0, %s64
      %s82 = sphi 0, %s82
      %s84 = sphi 0, %s82
      %s85 = sphi 0, %s84
      %s99 = sphi 0, %s85
      %s103 = sphi 0, %s103
      %s105 = sphi 0, %s103
      %s106 = sphi 0, %s105
      %s120 = sphi 0, %s106
      %s126 = sphi 0, %s128
      %s129 = sphi 0, %s126
      %s130 = sphi 0, %s129
      %s146 = sphi 0, %s130
    $region4: #{nima_forward.1} parent=1 // loop_header_branch
      %16 = sbr.rel (%p14) target = $region8
    $region5: #{nima_forward.1} parent=1 // loop_body
      %s18 = ssub.s32 %s13, 1
      %s19 = ssub.s32 %s13, 2
      %s26 = sadd.s32 1, %s21
      %p27 = scmp.ge.s32.totalorder %s26, 2
      %s28 = scalar_select %p27, 0, %s26
      %s29 = sadd.s32 1, %s20
      %s30 = scalar_select %p27, %s29, %s20
      %p31 = scmp.ge.s32.totalorder %s30, 2
      %s32 = scalar_select %p31, 0, %s30
      %s33 = ssub.s32 %s20, %s32
      %s34 = ssub.s32 %s21, %s28
      %s35 = sor.u32 %s33, %s34
      %p36 = scmp.eq.s32.totalorder %s35, 0
      %s38 = sadd.s32 %s37, 1
      %s39 = scalar_select %p36, %s37, %s38
      %p42 = pneg %p36
      %p43 = scmp.eq.s32.totalorder %s13, 3
      %p44 = por %p42, %p43
      %p45 = scmp.ne.s32.totalorder %s37, %s40
      %p46 = scmp.eq.s32.totalorder %s13, 0
      %p47 = por %p45, %p46
      %p48 = scmp.ne.s32.totalorder %s37, %s40
      %p49 = scmp.eq.s32.totalorder %s18, 3
      %p50 = por %p48, %p49
      %p51 = scmp.ne.s32.totalorder %s40, %s41
      %p52 = scmp.eq.s32.totalorder %s18, 0
      %p53 = por %p51, %p52
      %p54 = scmp.ne.s32.totalorder %s40, %s41
      %p55 = scmp.eq.s32.totalorder %s19, 3
      %p56 = por %p54, %p55
      %p58 = scmp.ne.s32.totalorder %s41, %s57
      %p59 = scmp.eq.s32.totalorder %s19, 0
      %p60 = por %p58, %p59
      %s62 = sadd.s32 %s61, 1
      %p65 = scmp.eq.s32.totalorder %s13, 3
      %p66 = scmp.ne.s32.totalorder %s61, %s63
      %p67 = scmp.eq.s32.totalorder %s13, 0
      %p68 = por %p66, %p67
      %p69 = scmp.ne.s32.totalorder %s61, %s63
      %p70 = scmp.eq.s32.totalorder %s18, 3
      %p71 = por %p69, %p70
      %p72 = scmp.ne.s32.totalorder %s63, %s64
      %p73 = scmp.eq.s32.totalorder %s18, 0
      %p74 = por %p72, %p73
      %p75 = scmp.ne.s32.totalorder %s63, %s64
      %p76 = scmp.eq.s32.totalorder %s19, 3
      %p77 = por %p75, %p76
      %p79 = scmp.ne.s32.totalorder %s64, %s78
      %p80 = scmp.eq.s32.totalorder %s19, 0
      %p81 = por %p79, %p80
      %s83 = sadd.s32 %s82, 1
      %p86 = scmp.eq.s32.totalorder %s13, 3
      %p87 = scmp.ne.s32.totalorder %s82, %s84
      %p88 = scmp.eq.s32.totalorder %s13, 0
      %p89 = por %p87, %p88
      %p90 = scmp.ne.s32.totalorder %s82, %s84
      %p91 = scmp.eq.s32.totalorder %s18, 3
      %p92 = por %p90, %p91
      %p93 = scmp.ne.s32.totalorder %s84, %s85
      %p94 = scmp.eq.s32.totalorder %s18, 0
      %p95 = por %p93, %p94
      %p96 = scmp.ne.s32.totalorder %s84, %s85
      %p97 = scmp.eq.s32.totalorder %s19, 3
      %p98 = por %p96, %p97
      %p100 = scmp.ne.s32.totalorder %s85, %s99
      %p101 = scmp.eq.s32.totalorder %s19, 0
      %p102 = por %p100, %p101
      %s104 = sadd.s32 %s103, 1
      %p107 = scmp.eq.s32.totalorder %s13, 3
      %p108 = scmp.ne.s32.totalorder %s103, %s105
      %p109 = scmp.eq.s32.totalorder %s13, 0
      %p110 = por %p108, %p109
      %p111 = scmp.ne.s32.totalorder %s103, %s105
      %p112 = scmp.eq.s32.totalorder %s18, 3
      %p113 = por %p111, %p112
      %p114 = scmp.ne.s32.totalorder %s105, %s106
      %p115 = scmp.eq.s32.totalorder %s18, 0
      %p116 = por %p114, %p115
      %p117 = scmp.ne.s32.totalorder %s105, %s106
      %p118 = scmp.eq.s32.totalorder %s19, 3
      %p119 = por %p117, %p118
      %p121 = scmp.ne.s32.totalorder %s106, %s120
      %p122 = scmp.eq.s32.totalorder %s19, 0
      %p123 = por %p121, %p122
      %s124 = ssub.s32 %s20, %s32
      %p125 = scmp.eq.s32.totalorder %s124, 0
      %s127 = sadd.s32 %s126, 1
      %s128 = scalar_select %p125, %s126, %s127
      %p131 = pneg %p125
      %p132 = scmp.eq.s32.totalorder %s13, 3
      %p133 = por %p131, %p132
      %p134 = scmp.ne.s32.totalorder %s126, %s129
      %p135 = scmp.eq.s32.totalorder %s13, 0
      %p136 = por %p134, %p135
      %p137 = scmp.ne.s32.totalorder %s126, %s129
      %p138 = scmp.eq.s32.totalorder %s18, 3
      %p139 = por %p137, %p138
      %p140 = scmp.ne.s32.totalorder %s129, %s130
      %p141 = scmp.eq.s32.totalorder %s18, 0
      %p142 = por %p140, %p141
      %p143 = scmp.ne.s32.totalorder %s129, %s130
      %p144 = scmp.eq.s32.totalorder %s19, 3
      %p145 = por %p143, %p144
      %p147 = scmp.ne.s32.totalorder %s130, %s146
      %p148 = scmp.eq.s32.totalorder %s19, 0
      %p149 = por %p147, %p148
      %p150 = scmp.le.s32.totalorder 1, %s13
      %p151 = scmp.lt.s32.totalorder %s13, 5
      %p152 = pnand %p150, %p151
      %p153 = pneg %p152
      // Predicated region
      $region9: #{nima_forward.1} parent=5 // pred_check
        _
      $region10: #{nima_forward.1} parent=5 // pred_check_branch
        %155 = sbr.rel (%p152) target = $region12
      $region11: #{nima_forward.1} parent=5 // pred_region
        %s156 = ssub.s32 %s13, 1
        // Predicated region
        $region13: #{nima_forward.1} parent=11 // pred_check
          %p157 = pneg %p74
        $region14: #{nima_forward.1} parent=11 // pred_check_branch
          %159 = sbr.rel (%p157) target = $region16
        $region15: #{nima_forward.1} parent=11 // pred_region
          _
        $region16: #{nima_forward.1} parent=11 // pred_fallthru
          _
        // Predicated region
        $region17: #{nima_forward.1} parent=11 // pred_check
          %p160 = pneg %p95
        $region18: #{nima_forward.1} parent=11 // pred_check_branch
          %162 = sbr.rel (%p160) target = $region20
        $region19: #{nima_forward.1} parent=11 // pred_region
          _
        $region20: #{nima_forward.1} parent=11 // pred_fallthru
          _
        // Predicated region
        $region21: #{nima_forward.1} parent=11 // pred_check
          %p163 = pneg %p116
        $region22: #{nima_forward.1} parent=11 // pred_check_branch
          %165 = sbr.rel (%p163) target = $region24
        $region23: #{nima_forward.1} parent=11 // pred_region
          _
        $region24: #{nima_forward.1} parent=11 // pred_fallthru
          _
      $region12: #{nima_forward.1} parent=5 // pred_fallthru
        _
      %p166 = scmp.lt.s32.totalorder %s13, 4
      // Predicated region
      $region25: #{nima_forward.1} parent=5 // pred_check
        %p167 = pneg %p166
      $region26: #{nima_forward.1} parent=5 // pred_check_branch
        %169 = sbr.rel (%p167) target = $region28
      $region27: #{nima_forward.1} parent=5 // pred_region
        // Predicated region
        $region29: #{nima_forward.1} parent=27 // pred_check
          %p170 = pneg %p47
        $region30: #{nima_forward.1} parent=27 // pred_check_branch
          %172 = sbr.rel (%p170) target = $region32
        $region31: #{nima_forward.1} parent=27 // pred_region
          %p173 = scmp.lt.s32.totalorder %s20, 1
          %s174 = scalar_select %p173, %s20, 1
          %p175 = scmp.lt.s32.totalorder %s21, 1
          %s176 = scalar_select %p175, %s21, 1
          %s177 = smul.addr %s174, 2
          %s178 = sadd.s32 %s176, %s177
          %s179 = smul.addr %s178, 2
          %s180 = scalar_lea.vmem %s0, %s179
        $region32: #{nima_forward.1} parent=27 // pred_fallthru
          _
      $region28: #{nima_forward.1} parent=5 // pred_fallthru
        _
      %p181 = scmp.le.s32.totalorder 1, %s13
      %p182 = scmp.lt.s32.totalorder %s13, 5
      %p183 = pnand %p181, %p182
      %p184 = pneg %p183
      // Predicated region
      $region33: #{nima_forward.1} parent=5 // pred_check
        _
      $region34: #{nima_forward.1} parent=5 // pred_check_branch
        %186 = sbr.rel (%p183) target = $region36
      $region35: #{nima_forward.1} parent=5 // pred_region
        %s187 = ssub.s32 %s13, 1
        %p188 = scmp.lt.s32.totalorder %s22, 1
        %s189 = scalar_select %p188, %s22, 1
        %p190 = scmp.lt.s32.totalorder %s23, 1
        %s191 = scalar_select %p190, %s23, 1
        %s192 = smul.addr %s189, 2
        %s193 = sadd.s32 %s191, %s192
        %s194 = smul.addr %s193, 2
        %s195 = scalar_lea.vmem %s0, %s194
        %p196 = pneg %p53
        %p197 = pneg %p50
        %p198 = pneg %p74
        %p199 = pneg %p71
        %p200 = pneg %p95
        %p201 = pneg %p92
        %p202 = pneg %p116
        %p203 = pneg %p113
        %p204 = pneg %p142
        %p205 = pneg %p139
        %s206 = sand.u32 %s129, 1
        %s207 = scalar_lea.sflag [#allocation4], %s206
        %s208 = sand.u32 %s129, 1
        %s209 = scalar_lea.vmem [#allocation3], %s208
        %p210 = scmp.lt.s32.totalorder %s22, 1
        %s211 = scalar_select %p210, %s22, 1
        %p212 = scmp.lt.s32.totalorder %s23, 1
        %s213 = scalar_select %p212, %s23, 1
        %s214 = smul.addr %s211, 2
        %s215 = sadd.s32 %s213, %s214
        %s216 = smul.addr %s215, 2
        %s217 = scalar_lea.vmem %s0, %s216
        %p219 = scmp.eq.s32.totalorder %s23, 0
        // Predicated region
        $region37: #{nima_forward.1} parent=35 // pred_check
          %p220 = pneg %p219
        $region38: #{nima_forward.1} parent=35 // pred_check_branch
          %222 = sbr.rel (%p220) target = $region40
        $region39: #{nima_forward.1} parent=35 // pred_region
          %vm223 = vcmask 7168
          %224 = vst.msk [vmem:[#allocation2] sm:$0xff] %vm223, 0.0
          %225 = vst.msk [vmem:[#allocation2 + $0x8] sm:$0xff] %vm223, 0.0
          %226 = vst.msk [vmem:[#allocation2 + $0x10] sm:$0xff] %vm223, 0.0
          %227 = vst.msk [vmem:[#allocation2 + $0x18] sm:$0xff] %vm223, 0.0
        $region40: #{nima_forward.1} parent=35 // pred_fallthru
          _
        %v228 = vld [vmem:[%s1] sm:$0xf]
        %v229 = vld [vmem:[%s1 + $0x4] sm:$0xf]
        %v230 = vld [vmem:[%s1 + $0x8] sm:$0xf]
        %v231 = vld [vmem:[%s1 + $0xc] sm:$0xf]
        %v232 = vld [vmem:[%s217] sm:$0x3]
        %v237 = vunpack.c.l.b16 %v228
        %v238 = vunpack.c.l.b16 %v229
        %v239 = vunpack.c.l.b16 %v230
        %v240 = vunpack.c.l.b16 %v231
        %v241 = vpack.c.b16 %v238, %v237
        %v242 = vpack.c.b16 %v240, %v239
        %vm243 = vcmask 31744
        %v245 = vsel %vm243, %v241, 0
        %v248 = vsel %vm243, %v242, 0
        %vm250 = vcmask 1041408
        %v252 = vsel %vm250, %v232, 0
        %254 = vmatprep.subr.bf16.mxu0 0
        %255 = vmatpush1.bf16.msra.mxu0 0
        %256 = vmatprep.subr.bf16.mxu0 0
        %257 = vmatpush1.bf16.msra.mxu0 0
        %258 = vmatprep.subr.bf16.mxu0 0
        %259 = vmatpush1.bf16.msra.mxu0 0
        %260 = vmatprep.subr.bf16.mxu0 0
        %261 = vmatpush1.bf16.msra.mxu0 0
        %262 = vmatprep.subr.bf16.mxu0 0
        %263 = vmatpush1.bf16.msra.mxu0 0
        %264 = vmatprep.subr.bf16.mxu0 0
        %265 = vmatpush1.bf16.msra.mxu0 0
        %266 = vmatprep.subr.bf16.mxu0 0
        %267 = vmatpush1.bf16.msra.mxu0 0
        %268 = vmatprep.subr.bf16.mxu0 0
        %269 = vmatpush1.bf16.msra.mxu0 %v252
        %270 = vmatprep.subr.bf16.mxu0 0
        %271 = vmatpush2.bf16.msra.mxu0 0
        %272 = vmatprep.subr.bf16.mxu0 0
        %273 = vmatpush2.bf16.msra.mxu0 0
        %274 = vmatprep.subr.bf16.mxu0 0
        %275 = vmatpush2.bf16.msra.mxu0 0
        %276 = vmatprep.subr.bf16.mxu0 0
        %277 = vmatpush2.bf16.msra.mxu0 0
        %278 = vmatprep.subr.bf16.mxu0 0
        %279 = vmatpush2.bf16.msra.mxu0 0
        %280 = vmatprep.subr.bf16.mxu0 0
        %281 = vmatpush2.bf16.msra.mxu0 0
        %282 = vmatprep.subr.bf16.mxu0 0
        %283 = vmatpush2.bf16.msra.mxu0 0
        %284 = vmatprep.subr.bf16.mxu0 0
        %285 = vmatpush2.bf16.msra.mxu0 0
        %286 = vmatprep.mubr.bf16.mxu0 0
        %287 = vmatmul.mubr.bf16.gmra.mxu0 %v245
        %v288 = vpop.f32.mrf.mxu0
        %v289 = vadd.f32 0.0, %v288
        %v290 = vpop.f32.mrf.mxu0
        %v291 = vpop.f32.mrf.mxu0
        %v292 = vadd.f32 0.0, %v291
        %v293 = vpop.f32.mrf.mxu0
        %294 = vmatprep.mubr.bf16.mxu0 0
        %295 = vmatmul.mubr.bf16.gmra.mxu0 %v248
        %v296 = vpop.f32.mrf.mxu0
        %v297 = vadd.f32 0.0, %v296
        %v298 = vpop.f32.mrf.mxu0
        %v299 = vpop.f32.mrf.mxu0
        %v300 = vadd.f32 0.0, %v299
        %v301 = vpop.f32.mrf.mxu0
        %302 = vdwg.mxu0
        %v303 = vmax.f32 %v289, 0.0
        %v304 = vmax.f32 %v292, 0.0
        %v305 = vmax.f32 %v297, 0.0
        %v306 = vmax.f32 %v300, 0.0
        %v307 = vld [vmem:[#allocation2] sm:$0xff]
        %v308 = vld [vmem:[#allocation2 + $0x8] sm:$0xff]
        %v309 = vld [vmem:[#allocation2 + $0x10] sm:$0xff]
        %v310 = vld [vmem:[#allocation2 + $0x18] sm:$0xff]
        %311 = vadd.xlane.f32.xlu0 %v303
        %v312 = vpop.xlane.xlu0 %311
        %313 = vadd.xlane.f32.xlu0 %v304
        %v314 = vpop.xlane.xlu0 %313
        %315 = vadd.xlane.f32.xlu0 %v305
        %v316 = vpop.xlane.xlu0 %315
        %317 = vadd.xlane.f32.xlu0 %v306
        %v318 = vpop.xlane.xlu0 %317
        %v319 = vadd.f32 %v307, %v312
        %v320 = vadd.f32 %v308, %v314
        %v321 = vadd.f32 %v309, %v316
        %v322 = vadd.f32 %v310, %v318
        %vm323 = vcmask 7168
        %324 = vst.msk [vmem:[#allocation2] sm:$0xff] %vm323, %v319
        %325 = vst.msk [vmem:[#allocation2 + $0x8] sm:$0xff] %vm323, %v320
        %326 = vst.msk [vmem:[#allocation2 + $0x10] sm:$0xff] %vm323, %v321
        %327 = vst.msk [vmem:[#allocation2 + $0x18] sm:$0xff] %vm323, %v322
        %p328 = scmp.eq.s32.totalorder %s23, 1
        // Predicated region
        $region41: #{nima_forward.1} parent=35 // pred_check
          %p329 = pneg %p328
        $region42: #{nima_forward.1} parent=35 // pred_check_branch
          %331 = sbr.rel (%p329) target = $region44
        $region43: #{nima_forward.1} parent=35 // pred_region
          %v332 = vld [vmem:[#allocation2] sm:$0xff]
          %v333 = vld [vmem:[#allocation2 + $0x8] sm:$0xff]
          %v334 = vld [vmem:[#allocation2 + $0x10] sm:$0xff]
          %v335 = vld [vmem:[#allocation2 + $0x18] sm:$0xff]
          %v336 = vmul.f32 %v332, 0.00390625
          %v337 = vmul.f32 %v333, 0.00390625
          %v338 = vmul.f32 %v334, 0.00390625
          %v339 = vmul.f32 %v335, 0.00390625
          %v340 = vld [vmem:[%s2] sm:$0xff]
          %v341 = vld [vmem:[%s2 + $0x8] sm:$0xff]
          %v342 = vld [vmem:[%s2 + $0x10] sm:$0xff]
          %v343 = vld [vmem:[%s2 + $0x18] sm:$0xff]
          %345 = vset.pattern.permute.xlu0 0
          %346 = vperm.xlu0 %345, %v336
          %v347 = vpop.permute.xlu0 %346
          %350 = vset.pattern.permute.xlu0 0
          %351 = vperm.xlu0 %350, %v337
          %v352 = vpop.permute.xlu0 %351
          %355 = vset.pattern.permute.xlu0 0
          %356 = vperm.xlu0 %355, %v338
          %v357 = vpop.permute.xlu0 %356
          %360 = vset.pattern.permute.xlu0 0
          %361 = vperm.xlu0 %360, %v339
          %v362 = vpop.permute.xlu0 %361
          %v364 = vmul.f32 %v347, %v340
          %v365 = vmul.f32 %v352, %v341
          %v366 = vmul.f32 %v357, %v342
          %v367 = vmul.f32 %v362, %v343
          %v368 = vadd.f32 %v364, %v365
          %v369 = vadd.f32 %v368, %v366
          %v370 = vadd.f32 %v369, %v367
          %v371 = vrot.slane %v370, 4
          %v372 = vadd.f32 %v370, %v371
          %v373 = vrot.slane %v372, 2
          %v374 = vadd.f32 %v372, %v373
          %v375 = vrot.slane %v374, 1
          %v376 = vadd.f32 %v374, %v375
          %v377 = vld [vmem:[%s3] sm:$0x1]
          %v378 = vadd.f32 %v376, %v377
          %vm379 = vcmask 1040384
          %v380 = vsel %vm379, %v378, -inf
          %381 = vmax.xlane.f32.xlu0 %v380
          %v382 = vpop.xlane.xlu0 %381
          %v383 = vsub.f32 %v378, %v382
          %v384 = vmul.f32 %v383, 1.442695
          %v385 = vpow.pop %v384
          %v386 = vsel %vm379, %v385, 0.0
          %387 = vadd.xlane.f32.xlu0 %v386
          %v388 = vpop.xlane.xlu0 %387
          %v389 = vrcp.pop %v388
          %v390 = vmul.f32 %v385, %v389
          %391 = vst [vmem:[%s209] sm:$0x1] %v390
        $region44: #{nima_forward.1} parent=35 // pred_fallthru
          _
        %s392 = sand.u32 %s129, 1
        %s393 = scalar_lea.sflag [#allocation4], %s392
        %s394 = sand.u32 %s129, 1
        %s395 = scalar_lea.vmem [#allocation3], %s394
        // Predicated region
        $region45: #{nima_forward.1} parent=35 // pred_check
          %p396 = pneg %p139
        $region46: #{nima_forward.1} parent=35 // pred_check_branch
          %398 = sbr.rel (%p396) target = $region48
        $region47: #{nima_forward.1} parent=35 // pred_region
          %s400 = ssub.s32 16, 16
          %401 = vsyncadd %s393, %s400
          %s402 = smul.addr %s22, 16
          %s403 = scalar_lea.hbm %s4, %s402
          %s405 = sshll.u32 %s395, 4
          %s406 = int_to_ptr.vmem [resolvable:$true] %s405
          %408 = dma.vmem_to_hbm [thread:$0]  %s406, 16, %s403, %s393
        $region48: #{nima_forward.1} parent=35 // pred_fallthru
          _
      $region36: #{nima_forward.1} parent=5 // pred_fallthru
        _
      %p409 = scmp.le.s32.totalorder 2, %s13
      // Predicated region
      $region49: #{nima_forward.1} parent=5 // pred_check
        %p410 = pneg %p409
      $region50: #{nima_forward.1} parent=5 // pred_check_branch
        %412 = sbr.rel (%p410) target = $region52
      $region51: #{nima_forward.1} parent=5 // pred_region
        %s413 = ssub.s32 %s13, 2
        // Predicated region
        $region53: #{nima_forward.1} parent=51 // pred_check
          %p414 = pneg %p145
        $region54: #{nima_forward.1} parent=51 // pred_check_branch
          %416 = sbr.rel (%p414) target = $region56
        $region55: #{nima_forward.1} parent=51 // pred_region
          %s417 = sand.u32 %s130, 1
          %s418 = scalar_lea.sflag [#allocation4], %s417
          %s419 = sand.u32 %s130, 1
          %s420 = scalar_lea.vmem [#allocation3], %s419
          %421 = dma.done %s418, 16
        $region56: #{nima_forward.1} parent=51 // pred_fallthru
          _
      $region52: #{nima_forward.1} parent=5 // pred_fallthru
        _
    $region6: #{nima_forward.1} parent=1 // loop_footer
      %s17 = sadd.s32 1, %s13
    $region7: #{nima_forward.1} parent=1 // loop_footer_branch
      %12 = sbr.rel target = $region3
    $region8: #{nima_forward.1} parent=1 // loop_exit
      _
    %422 = vsyncpa [#allocation4], 1
    %s423 = scalar_lea.sflag [#allocation4], 1
    %424 = vsyncpa %s423, 1

</llo_original>
